<compile_context>
chip_gen: v5e
topology: v5e:2x2
jax: 0.10.0
libtpu: 0.0.40
codegen_flags: <defaults>
</compile_context>

<pallas_src>
import numpy as np
import jax
import jax.numpy as jnp
from jax import lax
from jax.experimental import pallas as pl
from jax.experimental.pallas import tpu as pltpu

_LANE = 128
_Y_COEF = (65.481, 128.553, 24.966)


def _make_ssd_kernel(*, to_y, tr, s_count, n_valid_rows):
    """Build the streaming sum-of-squared-differences kernel.

    Block shapes seen by the kernel:
      x_ref, y_ref : (tb, C_k, tr, 128) in the input's native dtype
      o_ref        : (1, tb, 128) f32 lane-dense accumulator, resident across the
                     sequential (last) grid axis.
    """

    def kernel(x_ref, y_ref, o_ref):
        x = x_ref[...].astype(jnp.float32)   # upcast BEFORE subtract/square
        y = y_ref[...].astype(jnp.float32)
        if to_y:
            c0, c1, c2 = _Y_COEF
            px = (x[:, 0] * c0 + x[:, 1] * c1 + x[:, 2] * c2 + 16.0) * (1.0 / 255.0)
            py = (y[:, 0] * c0 + y[:, 1] * c1 + y[:, 2] * c2 + 16.0) * (1.0 / 255.0)
            d = px - py
        else:
            d = x[:, 0] - y[:, 0]

        # Mask rows past the valid per-sample row count.  This covers (a) the
        # ragged last row block (Pallas partial edge block -> stale data in the
        # buffer tail) and (b) the clamped duplicate block when the row-block
        # count is odd and split across the 2-way parallel row axis.
        row_blk = pl.program_id(1) * s_count + pl.program_id(2)
        rows = row_blk * tr + lax.broadcasted_iota(jnp.int32, d.shape, 1)
        d = jnp.where(rows < n_valid_rows, d, 0.0)

        partial = jnp.sum(d * d, axis=1)     # (tb, 128): sublane reduce only

        @pl.when(pl.program_id(2) == 0)
        def _():
            o_ref[...] = jnp.zeros_like(o_ref)

        o_ref[...] += partial[None]          # lane-dense, unmasked 128-wide store

    return kernel


def _per_sample_ssd(x4, y4, n_valid_rows, *, to_y, block_target_bytes):
    """Per-sample sum((x-y)^2) (of the fused-Y images when to_y).

    x4, y4: (B, C_k, r, 128) native-dtype lane-dense views. Returns f32 (B,).
    """
    B, c_k, r, lane = x4.shape
    assert lane == _LANE and y4.shape == x4.shape
    itemsize = jnp.dtype(x4.dtype).itemsize
    q = max(8, 32 // itemsize)                    # sublane quantum: f32->8, bf16->16
    row_bytes = c_k * _LANE * itemsize
    rows_target = max(q, block_target_bytes // row_bytes)

    if r > rows_target:
        # Big samples: one sample per block, tile the row axis.
        tb = 1
        tr = max(q, (min(rows_target, r) // q) * q)
    else:
        # Small samples: whole sample in one block; group samples to amortize the
        # per-grid-step overhead.  tb always divides B (no batch padding) and we
        # keep >= 2 batch blocks when B >= 2 so the parallel axis can shard.
        tr = r
        cap = max(1, rows_target // max(r, 1))
        if B >= 2:
            cap = min(cap, B // 2)
        cap = max(1, min(cap, B))
        tb = max(d for d in range(1, cap + 1) if B % d == 0)

    nb = B // tb
    nblocks = -(-r // tr)                         # row blocks per sample
    p_split = 2 if nblocks >= 2 else 1            # outer parallel row split (v7x TCs)
    s_count = -(-nblocks // p_split)              # sequential blocks per split

    def in_map(b, p, s):
        blk = jnp.minimum(p * s_count + s, nblocks - 1)   # clamp duplicate tail
        return (b, 0, blk, 0)

    kernel = _make_ssd_kernel(to_y=to_y, tr=tr, s_count=s_count,
                              n_valid_rows=n_valid_rows)

    in_block_bytes = tb * c_k * tr * _LANE * itemsize
    cost = pl.CostEstimate(
        flops=int((6 if to_y else 3) * x4.size),
        transcendentals=0,
        bytes_accessed=int(2 * x4.size * itemsize))

    out = pl.pallas_call(
        kernel,
        out_shape=jax.ShapeDtypeStruct((nb, tb, p_split * _LANE), jnp.float32),
        grid_spec=pltpu.PrefetchScalarGridSpec(
            num_scalar_prefetch=0,
            grid=(nb, p_split, s_count),
            in_specs=[
                pl.BlockSpec((tb, c_k, tr, _LANE), in_map),
                pl.BlockSpec((tb, c_k, tr, _LANE), in_map),
            ],
            out_specs=pl.BlockSpec((1, tb, _LANE), lambda b, p, s: (b, 0, p)),
        ),
        compiler_params=pltpu.CompilerParams(
            dimension_semantics=("parallel", "parallel", "arbitrary"),
            # 2 inputs x 2 buffers x block + headroom; also lifts v5e's 16 MiB default.
            vmem_limit_bytes=int(max(32 << 20, 6 * in_block_bytes)),
        ),
        cost_estimate=cost,
    )(x4, y4)

    # Tiny epilogue: lane reduce + row-split reduce over B * p_split * 128 floats.
    return out.reshape(B, p_split * _LANE).sum(axis=1)


def _lane_view(x, c_k, m):
    """(B, ...) -> (B, c_k, ceil(m/128), 128) lane-dense view in native dtype."""
    B = x.shape[0]
    x = x.reshape(B, c_k, m)
    r = -(-m // _LANE)
    pad = r * _LANE - m
    if pad:
        # TODO(synk): this lane-tail pad is a full-array copy; eliminating it needs a
        # (B, m) block layout whose HBM tiling is poor for small B, so we keep the
        # pad only for the (uncommon) m % 128 != 0 case.  Zero padding adds 0 to SSD.
        x = jnp.pad(x, ((0, 0), (0, 0), (0, pad)))
    return x.reshape(B, c_k, r, _LANE), r


def psnr_loss(pred, target, *, loss_weight=1.0, toY=False,
              block_target_bytes=4 << 20):
    """Pallas-backed forward of PSNRLoss (reduction='mean')."""
    assert pred.ndim == 4 and target.ndim == 4 and pred.shape == target.shape
    B, C, H, W = pred.shape
    scale = 10.0 / np.log(10.0)

    if toY:
        assert C == 3, "toY=True requires 3-channel (RGB) inputs"
        c_k, m = 3, H * W          # Y mix is fused over the channel dim in-kernel
    else:
        c_k, m = 1, C * H * W

    x4, _ = _lane_view(pred, c_k, m)
    y4, r = _lane_view(target, c_k, m)
    ssd = _per_sample_ssd(x4, y4, r, to_y=toY,
                          block_target_bytes=block_target_bytes)
    mse = ssd / jnp.float32(m)
    return -(loss_weight * scale * jnp.mean(jnp.log(mse + 1e-8)))


def _psnr_loss_reference(pred, target, *, loss_weight=1.0, toY=False):
    """Pure-JAX reference mirroring the PyTorch module exactly."""
    scale = 10.0 / np.log(10.0)
    pred = pred.astype(jnp.float32)
    target = target.astype(jnp.float32)
    if toY:
        coef = jnp.asarray(_Y_COEF, jnp.float32).reshape(1, 3, 1, 1)
        pred = ((pred * coef).sum(axis=1, keepdims=True) + 16.0) / 255.0
        target = ((target * coef).sum(axis=1, keepdims=True) + 16.0) / 255.0
    mse = jnp.mean((pred - target) ** 2, axis=(1, 2, 3))
    return -(loss_weight * scale * jnp.mean(jnp.log(mse + 1e-8)))


if __name__ == "__main__":
    key = jax.random.PRNGKey(0)
    cases = [
        # (shape, dtype, toY, extra kwargs)
        ((2, 3, 16, 16), jnp.float32, False, {}),                               # default path
        ((2, 3, 16, 16), jnp.float32, True, {}),                                # fused toY
        ((2, 3, 16, 16), jnp.bfloat16, False, {}),                              # native bf16 streaming
        ((2, 3, 16, 16), jnp.bfloat16, True, {}),                               # bf16 + fused toY
        ((8, 3, 16, 16), jnp.float32, False, {"block_target_bytes": 8192}),     # sample grouping (tb=2)
        ((2, 3, 40, 40), jnp.float32, False, {"block_target_bytes": 4096}),     # odd #row-blocks: clamp + ragged mask
        ((2, 3, 40, 40), jnp.float32, True, {"block_target_bytes": 4096}),      # toY multi-block + ragged mask
    ]
    for i, (shape, dt, to_y, kw) in enumerate(cases):
        kx, ky = jax.random.split(jax.random.fold_in(key, i))
        pred = jax.random.uniform(kx, shape, dtype=jnp.float32).astype(dt)
        target = jax.random.uniform(ky, shape, dtype=jnp.float32).astype(dt)
        loss = jax.block_until_ready(psnr_loss(pred, target, toY=to_y, **kw))
        ref = jax.block_until_ready(_psnr_loss_reference(pred, target, toY=to_y))
        assert np.isfinite(float(loss)), f"case {i}: loss is not finite"
        np.testing.assert_allclose(float(loss), float(ref), rtol=2e-5, atol=2e-5,
                                   err_msg=f"case {i}: shape={shape} toY={to_y}")
    print("KERNEL_OK")
</pallas_src>

<mosaic_0001>
module attributes {stable_mosaic.version = 11 : i64} {
  func.func @kernel(%arg0: i32, %arg1: i32, %arg2: i32, %arg3: memref<1x1x6x128xf32, #tpu.memory_space<vmem>>, %arg4: memref<1x1x6x128xf32, #tpu.memory_space<vmem>>, %arg5: memref<1x1x128xf32, #tpu.memory_space<vmem>>) attributes {dimension_semantics = [#tpu.dimension_semantics<parallel>, #tpu.dimension_semantics<parallel>, #tpu.dimension_semantics<arbitrary>], iteration_bounds = array<i64: 2, 1, 1>, scalar_prefetch = 0 : i64, scratch_operands = 0 : i64, tpu.core_type = #tpu.core_type<tc>, window_params = [{transform_indices = @transform_0, window_bounds = array<i64: 1, 1, 6, 128>}, {transform_indices = @transform_1, window_bounds = array<i64: 1, 1, 6, 128>}, {transform_indices = @transform_2, window_bounds = array<i64: 1, 1, 128>}]} {
    %c0 = arith.constant 0 : index
    %c0_0 = arith.constant 0 : index
    %c0_1 = arith.constant 0 : index
    %c0_2 = arith.constant 0 : index
    %0 = vector.load %arg3[%c0, %c0_0, %c0_1, %c0_2] : memref<1x1x6x128xf32, #tpu.memory_space<vmem>>, vector<1x1x6x128xf32>
    %c0_3 = arith.constant 0 : index
    %c0_4 = arith.constant 0 : index
    %c0_5 = arith.constant 0 : index
    %c0_6 = arith.constant 0 : index
    %1 = vector.load %arg4[%c0_3, %c0_4, %c0_5, %c0_6] : memref<1x1x6x128xf32, #tpu.memory_space<vmem>>, vector<1x1x6x128xf32>
    %2 = vector.shape_cast %0 : vector<1x1x6x128xf32> to vector<1x6x128xf32>
    %3 = vector.shape_cast %1 : vector<1x1x6x128xf32> to vector<1x6x128xf32>
    %4 = arith.subf %2, %3 : vector<1x6x128xf32>
    %c1_i32 = arith.constant 1 : i32
    %5 = arith.muli %arg1, %c1_i32 : i32
    %6 = arith.addi %5, %arg2 : i32
    %c6_i32 = arith.constant 6 : i32
    %7 = arith.muli %6, %c6_i32 : i32
    %8 = tpu.iota {dimensions = array<i32: 1>} : vector<1x6x128xi32>
    %9 = vector.broadcast %7 : i32 to vector<1x6x128xi32>
    %10 = arith.addi %9, %8 : vector<1x6x128xi32>
    %c6_i32_7 = arith.constant 6 : i32
    %11 = vector.broadcast %c6_i32_7 : i32 to vector<1x6x128xi32>
    %12 = arith.cmpi slt, %10, %11 : vector<1x6x128xi32>
    %cst = arith.constant 0.000000e+00 : f32
    %13 = vector.broadcast %cst : f32 to vector<1x6x128xf32>
    %14 = arith.select %12, %4, %13 : vector<1x6x128xi1>, vector<1x6x128xf32>
    %15 = arith.mulf %14, %14 : vector<1x6x128xf32>
    %cst_8 = arith.constant dense<0.000000e+00> : vector<1x128xf32>
    %16 = vector.multi_reduction <add>, %15, %cst_8 [1] : vector<1x6x128xf32> to vector<1x128xf32>
    %c0_i32 = arith.constant 0 : i32
    %17 = arith.cmpi eq, %arg2, %c0_i32 : i32
    %18 = arith.extui %17 : i1 to i32
    %c0_i32_9 = arith.constant 0 : i32
    %19 = arith.cmpi ne, %18, %c0_i32_9 : i32
    scf.if %19 {
      %cst_16 = arith.constant 0.000000e+00 : f32
      %24 = vector.broadcast %cst_16 : f32 to vector<1x1x128xf32>
      %c0_17 = arith.constant 0 : index
      %c0_18 = arith.constant 0 : index
      %c0_19 = arith.constant 0 : index
      %25 = vector.load %arg5[%c0_17, %c0_18, %c0_19] : memref<1x1x128xf32, #tpu.memory_space<vmem>>, vector<1x1x128xf32>
      tpu.vector_store %arg5[%c0_17, %c0_18, %c0_19], %24 {strides = array<i32>} : memref<1x1x128xf32, #tpu.memory_space<vmem>>, vector<1x1x128xf32>,
    } else {
    }
    %c0_10 = arith.constant 0 : index
    %c0_11 = arith.constant 0 : index
    %c0_12 = arith.constant 0 : index
    %20 = vector.load %arg5[%c0_10, %c0_11, %c0_12] : memref<1x1x128xf32, #tpu.memory_space<vmem>>, vector<1x1x128xf32>
    %21 = vector.shape_cast %16 : vector<1x128xf32> to vector<1x1x128xf32>
    %22 = arith.addf %20, %21 : vector<1x1x128xf32>
    %c0_13 = arith.constant 0 : index
    %c0_14 = arith.constant 0 : index
    %c0_15 = arith.constant 0 : index
    %23 = vector.load %arg5[%c0_13, %c0_14, %c0_15] : memref<1x1x128xf32, #tpu.memory_space<vmem>>, vector<1x1x128xf32>
    tpu.vector_store %arg5[%c0_13, %c0_14, %c0_15], %22 {strides = array<i32>} : memref<1x1x128xf32, #tpu.memory_space<vmem>>, vector<1x1x128xf32>,
    return
  }
  func.func @transform_0(%arg0: i32, %arg1: i32, %arg2: i32) -> (i32, i32, i32, i32) {
    %c1_i32 = arith.constant 1 : i32
    %0 = arith.muli %arg1, %c1_i32 : i32
    %1 = arith.addi %0, %arg2 : i32
    %c0_i32 = arith.constant 0 : i32
    %2 = arith.minsi %1, %c0_i32 : i32
    %c0_i32_0 = arith.constant 0 : i32
    %c0_i32_1 = arith.constant 0 : i32
    %c0_i32_2 = arith.constant 0 : i32
    return %arg0, %c0_i32_0, %2, %c0_i32_1 : i32, i32, i32, i32
  }
  func.func @transform_1(%arg0: i32, %arg1: i32, %arg2: i32) -> (i32, i32, i32, i32) {
    %c1_i32 = arith.constant 1 : i32
    %0 = arith.muli %arg1, %c1_i32 : i32
    %1 = arith.addi %0, %arg2 : i32
    %c0_i32 = arith.constant 0 : i32
    %2 = arith.minsi %1, %c0_i32 : i32
    %c0_i32_0 = arith.constant 0 : i32
    %c0_i32_1 = arith.constant 0 : i32
    %c0_i32_2 = arith.constant 0 : i32
    return %arg0, %c0_i32_0, %2, %c0_i32_1 : i32, i32, i32, i32
  }
  func.func @transform_2(%arg0: i32, %arg1: i32, %arg2: i32) -> (i32, i32, i32) {
    %c0_i32 = arith.constant 0 : i32
    %c0_i32_0 = arith.constant 0 : i32
    return %arg0, %c0_i32, %arg1 : i32, i32, i32
  }
}

</mosaic_0001>

<llo_original>
// kernel: tpu_custom_call.1
$region0: #{tpu_custom_call.1}
  #allocation0 [shape = 'u32[]', space=smem, size = 0x4, offset = 0x4, fixed_abs, tag = 'smem constant byte address 0x4 - core index']
  #allocation1 [shape = 'u32[72,128]{1,0:T(1,128)}', space=vmem, size = 0x9000, scoped, tag = 'internal scratch']
  %s0 = inlined_call_operand.vmem [shape: f32[2,1,6,128], index: 0, kind: input, shape index: {}]
  %s1 = inlined_call_operand.vmem [shape: f32[2,1,6,128], index: 1, kind: input, shape index: {}]
  %s2 = inlined_call_operand.hbm [shape: f32[2,1,128], index: 2, kind: output, shape index: {}]
  %s3 = sld [smem:[#allocation0]]
  $region45: #{tpu_custom_call.1} parent=0
    _
  %s5 = ssub.s32 1, %s3
  %s6 = scalar_select 0, %s5, %s3
  $region1: #{tpu_custom_call.1} parent=0
    #allocation2 [shape = 'u8[1024]{0}', space=vmem, size = 0x400, scoped, tag = 'output window, operand 0']
    #allocation3 [shape = 's32[2]{0}', space=sflag, size = 0x8, scoped, tag = 'scoped memory for tpu_custom_call.1']
    %7 = vsyncpa [#allocation3], 0
    %s8 = scalar_lea.sflag [#allocation3], 1
    %9 = vsyncpa %s8, 0
    loop: start=0, step=1, limit=4
    $region2: #{tpu_custom_call.1} parent=1 // loop_pre_header
      _
    $region3: #{tpu_custom_call.1} parent=1 // loop_header
      %s11 = sphi 0, %s15
      %p12 = scmp.ge.s32.totalorder %s11, 4
      %s18 = sphi 0, %s37
      %s19 = sphi 0, %s33
      %s20 = sphi 0, %s29
      %s21 = sphi 0, %s18
      %s22 = sphi 0, %s19
      %s23 = sphi 0, %s20
      %s24 = sphi 0, %s21
      %s25 = sphi 0, %s22
      %s26 = sphi 0, %s23
      %s48 = sphi 0, %s50
      %s51 = sphi 0, %s48
      %s52 = sphi 0, %s51
      %s68 = sphi 0, %s52
      %s82 = sphi 0, %s84
      %s85 = sphi 0, %s82
      %s86 = sphi 0, %s85
      %s102 = sphi 0, %s86
      %s110 = sphi 0, %s112
      %s113 = sphi 0, %s110
      %s114 = sphi 0, %s113
      %s130 = sphi 0, %s114
    $region4: #{tpu_custom_call.1} parent=1 // loop_header_branch
      %14 = sbr.rel (%p12) target = $region8
    $region5: #{tpu_custom_call.1} parent=1 // loop_body
      %s16 = ssub.s32 %s11, 1
      %s17 = ssub.s32 %s11, 2
      %s27 = sadd.s32 1, %s20
      %p28 = scmp.ge.s32.totalorder %s27, 1
      %s29 = scalar_select %p28, 0, %s27
      %s30 = sadd.s32 1, %s19
      %s31 = scalar_select %p28, %s30, %s19
      %p32 = scmp.ge.s32.totalorder %s31, 1
      %s33 = scalar_select %p32, 0, %s31
      %s34 = sadd.s32 1, %s18
      %s35 = scalar_select %p32, %s34, %s18
      %p36 = scmp.ge.s32.totalorder %s35, 2
      %s37 = scalar_select %p36, 0, %s35
      %s38 = sadd.s32 %s19, %s20
      %p39 = scmp.lt.s32.totalorder %s38, 0
      %s40 = scalar_select %p39, %s38, 0
      %s41 = sadd.s32 %s33, %s29
      %p42 = scmp.lt.s32.totalorder %s41, 0
      %s43 = scalar_select %p42, %s41, 0
      %s44 = ssub.s32 %s18, %s37
      %s45 = ssub.s32 %s40, %s43
      %s46 = sor.u32 %s44, %s45
      %p47 = scmp.eq.s32.totalorder %s46, 0
      %s49 = sadd.s32 %s48, 1
      %s50 = scalar_select %p47, %s48, %s49
      %p53 = pneg %p47
      %p54 = scmp.eq.s32.totalorder %s11, 1
      %p55 = por %p53, %p54
      %p56 = scmp.ne.s32.totalorder %s48, %s51
      %p57 = scmp.eq.s32.totalorder %s11, 0
      %p58 = por %p56, %p57
      %p59 = scmp.ne.s32.totalorder %s48, %s51
      %p60 = scmp.eq.s32.totalorder %s16, 1
      %p61 = por %p59, %p60
      %p62 = scmp.ne.s32.totalorder %s51, %s52
      %p63 = scmp.eq.s32.totalorder %s16, 0
      %p64 = por %p62, %p63
      %p65 = scmp.ne.s32.totalorder %s51, %s52
      %p66 = scmp.eq.s32.totalorder %s17, 1
      %p67 = por %p65, %p66
      %p69 = scmp.ne.s32.totalorder %s52, %s68
      %p70 = scmp.eq.s32.totalorder %s17, 0
      %p71 = por %p69, %p70
      %s72 = sadd.s32 %s19, %s20
      %p73 = scmp.lt.s32.totalorder %s72, 0
      %s74 = scalar_select %p73, %s72, 0
      %s75 = sadd.s32 %s33, %s29
      %p76 = scmp.lt.s32.totalorder %s75, 0
      %s77 = scalar_select %p76, %s75, 0
      %s78 = ssub.s32 %s18, %s37
      %s79 = ssub.s32 %s74, %s77
      %s80 = sor.u32 %s78, %s79
      %p81 = scmp.eq.s32.totalorder %s80, 0
      %s83 = sadd.s32 %s82, 1
      %s84 = scalar_select %p81, %s82, %s83
      %p87 = pneg %p81
      %p88 = scmp.eq.s32.totalorder %s11, 1
      %p89 = por %p87, %p88
      %p90 = scmp.ne.s32.totalorder %s82, %s85
      %p91 = scmp.eq.s32.totalorder %s11, 0
      %p92 = por %p90, %p91
      %p93 = scmp.ne.s32.totalorder %s82, %s85
      %p94 = scmp.eq.s32.totalorder %s16, 1
      %p95 = por %p93, %p94
      %p96 = scmp.ne.s32.totalorder %s85, %s86
      %p97 = scmp.eq.s32.totalorder %s16, 0
      %p98 = por %p96, %p97
      %p99 = scmp.ne.s32.totalorder %s85, %s86
      %p100 = scmp.eq.s32.totalorder %s17, 1
      %p101 = por %p99, %p100
      %p103 = scmp.ne.s32.totalorder %s86, %s102
      %p104 = scmp.eq.s32.totalorder %s17, 0
      %p105 = por %p103, %p104
      %s106 = ssub.s32 %s18, %s37
      %s107 = ssub.s32 %s19, %s33
      %s108 = sor.u32 %s106, %s107
      %p109 = scmp.eq.s32.totalorder %s108, 0
      %s111 = sadd.s32 %s110, 1
      %s112 = scalar_select %p109, %s110, %s111
      %p115 = pneg %p109
      %p116 = scmp.eq.s32.totalorder %s11, 1
      %p117 = por %p115, %p116
      %p118 = scmp.ne.s32.totalorder %s110, %s113
      %p119 = scmp.eq.s32.totalorder %s11, 0
      %p120 = por %p118, %p119
      %p121 = scmp.ne.s32.totalorder %s110, %s113
      %p122 = scmp.eq.s32.totalorder %s16, 1
      %p123 = por %p121, %p122
      %p124 = scmp.ne.s32.totalorder %s113, %s114
      %p125 = scmp.eq.s32.totalorder %s16, 0
      %p126 = por %p124, %p125
      %p127 = scmp.ne.s32.totalorder %s113, %s114
      %p128 = scmp.eq.s32.totalorder %s17, 1
      %p129 = por %p127, %p128
      %p131 = scmp.ne.s32.totalorder %s114, %s130
      %p132 = scmp.eq.s32.totalorder %s17, 0
      %p133 = por %p131, %p132
      %p134 = scmp.le.s32.totalorder 1, %s11
      %p135 = scmp.lt.s32.totalorder %s11, 3
      %p136 = pnand %p134, %p135
      %p137 = pneg %p136
      // Predicated region
      $region9: #{tpu_custom_call.1} parent=5 // pred_check
        _
      $region10: #{tpu_custom_call.1} parent=5 // pred_check_branch
        %139 = sbr.rel (%p136) target = $region12
      $region11: #{tpu_custom_call.1} parent=5 // pred_region
        %s140 = ssub.s32 %s11, 1
      $region12: #{tpu_custom_call.1} parent=5 // pred_fallthru
        _
      %p141 = scmp.lt.s32.totalorder %s11, 2
      // Predicated region
      $region13: #{tpu_custom_call.1} parent=5 // pred_check
        %p142 = pneg %p141
      $region14: #{tpu_custom_call.1} parent=5 // pred_check_branch
        %144 = sbr.rel (%p142) target = $region16
      $region15: #{tpu_custom_call.1} parent=5 // pred_region
        // Predicated region
        $region17: #{tpu_custom_call.1} parent=15 // pred_check
          %p145 = pneg %p58
        $region18: #{tpu_custom_call.1} parent=15 // pred_check_branch
          %147 = sbr.rel (%p145) target = $region20
        $region19: #{tpu_custom_call.1} parent=15 // pred_region
          %s148 = sadd.s32 %s19, %s20
          %p149 = scmp.lt.s32.totalorder %s148, 0
          %s150 = scalar_select %p149, %s148, 0
          %p151 = scmp.lt.s32.totalorder %s18, 1
          %s152 = scalar_select %p151, %s18, 1
          %p153 = scmp.lt.s32.totalorder %s150, 0
          %s154 = scalar_select %p153, %s150, 0
          %s155 = sadd.s32 %s154, %s152
          %s156 = smul.addr %s155, 8
          %s157 = scalar_lea.vmem %s0, %s156
          %s158 = sadd.s32 %s19, %s20
          %p159 = scmp.lt.s32.totalorder %s158, 0
          %s160 = scalar_select %p159, %s158, 0
        $region20: #{tpu_custom_call.1} parent=15 // pred_fallthru
          _
        // Predicated region
        $region21: #{tpu_custom_call.1} parent=15 // pred_check
          %p161 = pneg %p92
        $region22: #{tpu_custom_call.1} parent=15 // pred_check_branch
          %163 = sbr.rel (%p161) target = $region24
        $region23: #{tpu_custom_call.1} parent=15 // pred_region
          %s164 = sadd.s32 %s19, %s20
          %p165 = scmp.lt.s32.totalorder %s164, 0
          %s166 = scalar_select %p165, %s164, 0
          %p167 = scmp.lt.s32.totalorder %s18, 1
          %s168 = scalar_select %p167, %s18, 1
          %p169 = scmp.lt.s32.totalorder %s166, 0
          %s170 = scalar_select %p169, %s166, 0
          %s171 = sadd.s32 %s170, %s168
          %s172 = smul.addr %s171, 8
          %s173 = scalar_lea.vmem %s1, %s172
          %s174 = sadd.s32 %s19, %s20
          %p175 = scmp.lt.s32.totalorder %s174, 0
          %s176 = scalar_select %p175, %s174, 0
        $region24: #{tpu_custom_call.1} parent=15 // pred_fallthru
          _
      $region16: #{tpu_custom_call.1} parent=5 // pred_fallthru
        _
      %p177 = scmp.le.s32.totalorder 1, %s11
      %p178 = scmp.lt.s32.totalorder %s11, 3
      %p179 = pnand %p177, %p178
      %p180 = pneg %p179
      // Predicated region
      $region25: #{tpu_custom_call.1} parent=5 // pred_check
        _
      $region26: #{tpu_custom_call.1} parent=5 // pred_check_branch
        %182 = sbr.rel (%p179) target = $region28
      $region27: #{tpu_custom_call.1} parent=5 // pred_region
        %s183 = ssub.s32 %s11, 1
        %s184 = sadd.s32 %s22, %s23
        %p185 = scmp.lt.s32.totalorder %s184, 0
        %s186 = scalar_select %p185, %s184, 0
        %p187 = scmp.lt.s32.totalorder %s21, 1
        %s188 = scalar_select %p187, %s21, 1
        %p189 = scmp.lt.s32.totalorder %s186, 0
        %s190 = scalar_select %p189, %s186, 0
        %s191 = sadd.s32 %s190, %s188
        %s192 = smul.addr %s191, 8
        %s193 = scalar_lea.vmem %s0, %s192
        %p194 = pneg %p64
        %p195 = pneg %p61
        %s196 = sadd.s32 %s22, %s23
        %p197 = scmp.lt.s32.totalorder %s196, 0
        %s198 = scalar_select %p197, %s196, 0
        %p199 = scmp.lt.s32.totalorder %s21, 1
        %s200 = scalar_select %p199, %s21, 1
        %p201 = scmp.lt.s32.totalorder %s198, 0
        %s202 = scalar_select %p201, %s198, 0
        %s203 = sadd.s32 %s202, %s200
        %s204 = smul.addr %s203, 8
        %s205 = scalar_lea.vmem %s1, %s204
        %p206 = pneg %p98
        %p207 = pneg %p95
        %p208 = pneg %p126
        %p209 = pneg %p123
        %s210 = sand.u32 %s113, 1
        %s211 = scalar_lea.sflag [#allocation3], %s210
        %s212 = sand.u32 %s113, 1
        %s213 = scalar_lea.vmem [#allocation2], %s212
        %s214 = sadd.s32 %s22, %s23
        %p215 = scmp.lt.s32.totalorder %s214, 0
        %s216 = scalar_select %p215, %s214, 0
        %p217 = scmp.lt.s32.totalorder %s21, 1
        %s218 = scalar_select %p217, %s21, 1
        %p219 = scmp.lt.s32.totalorder %s216, 0
        %s220 = scalar_select %p219, %s216, 0
        %s221 = sadd.s32 %s220, %s218
        %s222 = smul.addr %s221, 8
        %s223 = scalar_lea.vmem %s0, %s222
        %s224 = sadd.s32 %s22, %s23
        %p225 = scmp.lt.s32.totalorder %s224, 0
        %s226 = scalar_select %p225, %s224, 0
        %s227 = sadd.s32 %s22, %s23
        %p228 = scmp.lt.s32.totalorder %s227, 0
        %s229 = scalar_select %p228, %s227, 0
        %p230 = scmp.lt.s32.totalorder %s21, 1
        %s231 = scalar_select %p230, %s21, 1
        %p232 = scmp.lt.s32.totalorder %s229, 0
        %s233 = scalar_select %p232, %s229, 0
        %s234 = sadd.s32 %s233, %s231
        %s235 = smul.addr %s234, 8
        %s236 = scalar_lea.vmem %s1, %s235
        %s237 = sadd.s32 %s22, %s23
        %p238 = scmp.lt.s32.totalorder %s237, 0
        %s239 = scalar_select %p238, %s237, 0
        %v240 = vld [vmem:[%s223] sm:$0x3f]
        %v241 = vld [vmem:[%s236] sm:$0x3f]
        %v242 = vsub.f32 %v240, %v241
        %s243 = sadd.s32 %s22, %s23
        %s244 = smul.u32 %s243, 6
        %v245 = vlaneseq
        %v246 = vshrl.u32 %v245, 7
        %v247 = vstv %s244
        %v248 = vadd.s32 %v247, %v246
        %vm249 = vcmp.lt.s32.totalorder %v248, 6
        %v250 = vsel %vm249, %v242, 0.0
        %v251 = vmul.f32 %v250, %v250
        %vm252 = vcmask 1045504
        %v253 = vsel %vm252, %v251, 0.0
        %v254 = vrot.slane %v253, 4
        %v255 = vadd.f32 %v253, %v254
        %v256 = vrot.slane %v255, 2
        %v257 = vadd.f32 %v255, %v256
        %v258 = vrot.slane %v257, 1
        %v259 = vadd.f32 %v257, %v258
        %p260 = scmp.eq.s32.totalorder %s23, 0
        // Predicated region
        $region29: #{tpu_custom_call.1} parent=27 // pred_check
          %p261 = pneg %p260
        $region30: #{tpu_custom_call.1} parent=27 // pred_check_branch
          %263 = sbr.rel (%p261) target = $region32
        $region31: #{tpu_custom_call.1} parent=27 // pred_region
          %264 = vst [vmem:[%s213] sm:$0x1] 0.0
        $region32: #{tpu_custom_call.1} parent=27 // pred_fallthru
          _
        %v265 = vld [vmem:[%s213] sm:$0x1]
        %v266 = vadd.f32 %v265, %v259
        %267 = vst [vmem:[%s213] sm:$0x1] %v266
        %s268 = sand.u32 %s113, 1
        %s269 = scalar_lea.sflag [#allocation3], %s268
        %s270 = sand.u32 %s113, 1
        %s271 = scalar_lea.vmem [#allocation2], %s270
        // Predicated region
        $region33: #{tpu_custom_call.1} parent=27 // pred_check
          %p272 = pneg %p123
        $region34: #{tpu_custom_call.1} parent=27 // pred_check_branch
          %274 = sbr.rel (%p272) target = $region36
        $region35: #{tpu_custom_call.1} parent=27 // pred_region
          %276 = vsyncadd %s269, 0
          %s277 = sadd.s32 %s22, %s21
          %s278 = scalar_lea.hbm %s2, %s277
          %s280 = sshll.u32 %s271, 4
          %s281 = int_to_ptr.vmem [resolvable:$true] %s280
          %s282 = sshll.u32 %s278, 4
          %s283 = int_to_ptr.hbm [resolvable:$true] %s282
          %285 = dma.vmem_to_hbm [thread:$0]  %s281, 16, %s283, %s269
        $region36: #{tpu_custom_call.1} parent=27 // pred_fallthru
          _
      $region28: #{tpu_custom_call.1} parent=5 // pred_fallthru
        _
      %p286 = scmp.le.s32.totalorder 2, %s11
      // Predicated region
      $region37: #{tpu_custom_call.1} parent=5 // pred_check
        %p287 = pneg %p286
      $region38: #{tpu_custom_call.1} parent=5 // pred_check_branch
        %289 = sbr.rel (%p287) target = $region40
      $region39: #{tpu_custom_call.1} parent=5 // pred_region
        %s290 = ssub.s32 %s11, 2
        // Predicated region
        $region41: #{tpu_custom_call.1} parent=39 // pred_check
          %p291 = pneg %p129
        $region42: #{tpu_custom_call.1} parent=39 // pred_check_branch
          %293 = sbr.rel (%p291) target = $region44
        $region43: #{tpu_custom_call.1} parent=39 // pred_region
          %s294 = sand.u32 %s114, 1
          %s295 = scalar_lea.sflag [#allocation3], %s294
          %s296 = sand.u32 %s114, 1
          %s297 = scalar_lea.vmem [#allocation2], %s296
          %299 = dma.done %s295, 16
        $region44: #{tpu_custom_call.1} parent=39 // pred_fallthru
          _
      $region40: #{tpu_custom_call.1} parent=5 // pred_fallthru
        _
    $region6: #{tpu_custom_call.1} parent=1 // loop_footer
      %s15 = sadd.s32 1, %s11
    $region7: #{tpu_custom_call.1} parent=1 // loop_footer_branch
      %10 = sbr.rel target = $region3
    $region8: #{tpu_custom_call.1} parent=1 // loop_exit
      _
    %300 = vsyncpa [#allocation3], 1
    %s301 = scalar_lea.sflag [#allocation3], 1
    %302 = vsyncpa %s301, 1

</llo_original>
